<compile_context>
chip_gen: v7x
topology: tpu7x:2x2x1
jax: 0.10.0
libtpu: 0.0.40
codegen_flags: <defaults>
</compile_context>

<pallas_src>
import numpy as np
import jax
import jax.numpy as jnp
from jax.experimental import pallas as pl
from jax.experimental.pallas import tpu as pltpu

K = 7
STRIDE = 3
IMG = 28
CONV_OUT = 8                                  # (28 - 7) // 3 + 1
CCONV = 4                                     # conv output channels
FEAT = CONV_OUT * CONV_OUT * CCONV            # 256 conv features / sample
GROUP_OH = 4                                  # conv output rows per group (2 groups)
GROUP_ROWS = STRIDE * (GROUP_OH - 1) + K      # 16 input rows feed one group
XCOLS = GROUP_ROWS * IMG                      # 448 raw pixels per group
FEATG = GROUP_OH * CONV_OUT * CCONV           # 128 conv features per group
HIDDEN = 64
HPAD = 128                                    # hidden padded to full lane width
OUTPUT = 10
OPAD = 128                                    # logits padded to full lane width


# ---------------- Pallas kernel (fused forward for one batch tile) ----------------

def convnet_kernel(xa_ref, xb_ref, wg_ref, bc_ref, w1a_ref, w1b_ref, b1_ref,
                   w2_ref, b2_ref, o_ref):
    wg = wg_ref[...]                                           # (448, 128) bf16, shared by both groups
    # conv1 on raw pixel rows: group 0 = output rows 0-3, group 1 = rows 4-7.
    y0 = jnp.dot(xa_ref[...], wg, preferred_element_type=jnp.float32) + bc_ref[...]
    y1 = jnp.dot(xb_ref[...], wg, preferred_element_type=jnp.float32) + bc_ref[...]
    y0 = (y0 * y0).astype(jnp.bfloat16)                        # (bt, 128) squared conv features 0..127
    y1 = (y1 * y1).astype(jnp.bfloat16)                        # (bt, 128) squared conv features 128..255
    # fc1 (NCHW flatten permutation folded into weight rows; hidden padded 64->128), then x*x
    h = (jnp.dot(y0, w1a_ref[...], preferred_element_type=jnp.float32)
         + jnp.dot(y1, w1b_ref[...], preferred_element_type=jnp.float32)
         + b1_ref[...])
    h = (h * h).astype(jnp.bfloat16)                           # (bt, 128)
    # fc2 (output padded 10->128 so the HBM store is lane dense)
    o_ref[...] = jnp.dot(h, w2_ref[...], preferred_element_type=jnp.float32) + b2_ref[...]


# ---------------- one-time weight preprocessing ----------------

def prepare_params(params):
    wc = np.asarray(params["wc"], np.float32)        # (4, 1, 7, 7)
    bc = np.asarray(params["bc"], np.float32)        # (4,)
    w1 = np.asarray(params["w1"], np.float32)        # (64, 256)
    b1 = np.asarray(params["b1"], np.float32)        # (64,)
    w2 = np.asarray(params["w2"], np.float32)        # (10, 64)
    b2 = np.asarray(params["b2"], np.float32)        # (10,)

    # Conv weight with the im2col selection folded in:
    #   wg[r*28 + s, (oh*8 + ow)*4 + c] = wc[c, 0, r - 3*oh, s - 3*ow]  (when in range)
    # for oh in [0, 4).  The same matrix serves output rows 4-7 (translation
    # invariance): those rows read input rows 12..27 instead of 0..15.
    oh, ow, c, kh, kw = np.meshgrid(np.arange(GROUP_OH), np.arange(CONV_OUT),
                                    np.arange(CCONV), np.arange(K), np.arange(K),
                                    indexing="ij")
    rows = (STRIDE * oh + kh) * IMG + (STRIDE * ow + kw)       # raw pixel index within the group
    cols = (oh * CONV_OUT + ow) * CCONV + c                    # conv feature index within the group
    wg = np.zeros((XCOLS, FEATG), np.float32)
    wg[rows.ravel(), cols.ravel()] = wc[c.ravel(), 0, kh.ravel(), kw.ravel()]
    bc_half = np.tile(bc, GROUP_OH * CONV_OUT).reshape(1, FEATG)   # [p*4 + c] = bc[c]

    # fc1: fold the torch NCHW flatten index (c*64 + p) into the weight rows so the
    # kernel's natural feature order (p*4 + c) needs no transpose; pad hidden 64->128,
    # split into the two position groups.
    nat = np.arange(FEAT)
    perm = (nat % CCONV) * (CONV_OUT * CONV_OUT) + nat // CCONV    # natural idx -> torch idx
    w1_perm = w1.T[perm]                                           # (256, 64)
    w1_pad = np.pad(w1_perm, ((0, 0), (0, HPAD - HIDDEN)))         # (256, 128)
    b1_pad = np.pad(b1, (0, HPAD - HIDDEN)).reshape(1, HPAD)

    # fc2: pad input rows 64->128 and output cols 10->128 with zeros.
    w2_pad = np.pad(w2.T, ((0, HPAD - HIDDEN), (0, OPAD - OUTPUT)))  # (128, 128)
    b2_pad = np.pad(b2, (0, OPAD - OUTPUT)).reshape(1, OPAD)

    bf = jnp.bfloat16
    return {
        "wg": jnp.asarray(wg, bf),                     # (448, 128)  shared conv weight
        "bc": jnp.asarray(bc_half, jnp.float32),       # (1, 128)    conv bias (same for both groups)
        "w1a": jnp.asarray(w1_pad[:FEATG], bf),        # (128, 128)  fc1 rows for features 0..127
        "w1b": jnp.asarray(w1_pad[FEATG:], bf),        # (128, 128)  fc1 rows for features 128..255
        "b1": jnp.asarray(b1_pad, jnp.float32),        # (1, 128)
        "w2": jnp.asarray(w2_pad, bf),                 # (128, 128)
        "b2": jnp.asarray(b2_pad, jnp.float32),        # (1, 128)
    }


# ---------------- JAX glue ----------------

def convnet_forward(x, kparams, *, block_b=256):
    """x: (B, 1, 28, 28) float32 NCHW -> (B, 10) logits."""
    B = x.shape[0]
    img = x.reshape(B, IMG, IMG).astype(jnp.bfloat16)
    # Raw pixel rows for each conv-output-row group (no im2col, no patch padding):
    xa = img[:, 0:GROUP_ROWS, :].reshape(B, XCOLS)             # rows  0..15 -> output rows 0-3
    xb = img[:, IMG - GROUP_ROWS:IMG, :].reshape(B, XCOLS)     # rows 12..27 -> output rows 4-7

    # Batch tile: multiple of 8 sublanes and always >= 2 grid steps, so the
    # software pipeline overlaps DMA with compute and v7x can shard the
    # "parallel" batch axis across both TensorCores.
    bt = min(block_b, max(8, 8 * pl.cdiv(pl.cdiv(B, 2), 8)))
    n_tiles = max(2, pl.cdiv(B, bt))
    Bp = n_tiles * bt
    if Bp != B:                                                # pad batch to whole tiles
        pad = ((0, Bp - B), (0, 0))
        xa = jnp.pad(xa, pad)
        xb = jnp.pad(xb, pad)

    batch_spec = lambda: pl.BlockSpec((bt, XCOLS), lambda i: (i, 0))
    # Weights/biases: constant index_map -> DMA'd once and VMEM-resident; a
    # second pipeline buffer would be pure VMEM waste, hence Buffered(1).
    const_spec = lambda shape: pl.BlockSpec(shape, lambda i: (0, 0),
                                            pipeline_mode=pl.Buffered(buffer_count=1))

    flops = 2 * Bp * (2 * XCOLS * FEATG + 2 * FEATG * HPAD + HPAD * OPAD)
    bytes_accessed = (2 * Bp * XCOLS * 2                       # xa, xb (bf16)
                      + (XCOLS * FEATG + 3 * HPAD * OPAD) * 2  # bf16 weights
                      + 3 * OPAD * 4                           # f32 biases
                      + Bp * OPAD * 4)                         # f32 padded logits
    cost = pl.CostEstimate(flops=flops, transcendentals=0, bytes_accessed=bytes_accessed)

    out = pl.pallas_call(
        convnet_kernel,
        out_shape=jax.ShapeDtypeStruct((Bp, OPAD), jnp.float32),
        grid=(n_tiles,),
        in_specs=[
            batch_spec(),                          # xa: pixel rows for conv group 0
            batch_spec(),                          # xb: pixel rows for conv group 1
            const_spec((XCOLS, FEATG)),            # shared conv weight
            const_spec((1, FEATG)),                # conv bias
            const_spec((FEATG, HPAD)),             # fc1 weight, rows 0..127
            const_spec((FEATG, HPAD)),             # fc1 weight, rows 128..255
            const_spec((1, HPAD)),                 # fc1 bias
            const_spec((HPAD, OPAD)),              # fc2 weight
            const_spec((1, OPAD)),                 # fc2 bias
        ],
        out_specs=pl.BlockSpec((bt, OPAD), lambda i: (i, 0)),
        compiler_params=pltpu.CompilerParams(
            dimension_semantics=("parallel",),     # v7x: batch tiles across both TCs
            vmem_limit_bytes=32 * 1024 * 1024),    # explicit headroom (v5e default is 16 MiB)
        cost_estimate=cost,
    )(xa, xb, kparams["wg"], kparams["bc"], kparams["w1a"], kparams["w1b"],
      kparams["b1"], kparams["w2"], kparams["b2"])

    return out[:B, :OUTPUT]


# ---------------- deterministic parameter init ----------------

def init_params(key):
    ks = jax.random.split(key, 6)
    def u(k, shape, fan_in):
        bound = 1.0 / jnp.sqrt(fan_in)
        return jax.random.uniform(k, shape, jnp.float32, -bound, bound)
    return {
        "wc": u(ks[0], (CCONV, 1, K, K), 1 * K * K),
        "bc": u(ks[1], (CCONV,), 1 * K * K),
        "w1": u(ks[2], (HIDDEN, FEAT), FEAT),
        "b1": u(ks[3], (HIDDEN,), FEAT),
        "w2": u(ks[4], (OUTPUT, HIDDEN), HIDDEN),
        "b2": u(ks[5], (OUTPUT,), HIDDEN),
    }


# ---------------- pure-JAX reference (correctness sanity check) ----------------

def reference_forward(x, params):
    y = jax.lax.conv_general_dilated(
        x, params["wc"], window_strides=(STRIDE, STRIDE), padding="VALID",
        dimension_numbers=("NCHW", "OIHW", "NCHW"))
    y = y + params["bc"].reshape(1, CCONV, 1, 1)
    y = y * y
    y = y.reshape(x.shape[0], FEAT)
    h = y @ params["w1"].T + params["b1"]
    h = h * h
    return h @ params["w2"].T + params["b2"]


if __name__ == "__main__":
    key = jax.random.PRNGKey(0)
    k_x, k_p = jax.random.split(key)
    B = 2
    x = jax.random.normal(k_x, (B, 1, 28, 28), jnp.float32)   # NCHW, matches torch conv input
    params = init_params(k_p)
    kparams = prepare_params(params)                          # one-time preprocessing

    fwd = jax.jit(convnet_forward)
    out = jax.block_until_ready(fwd(x, kparams))
    assert out.shape == (B, OUTPUT)

    ref = jax.block_until_ready(reference_forward(x, params))
    # bf16 MXU operands (f32 accumulation): tolerance relaxed vs. f32 reference,
    # as flagged in the review's correctness notes.
    assert jnp.allclose(out, ref, atol=4e-2, rtol=4e-2), "mismatch vs pure-JAX reference"

    print("KERNEL_OK")
</pallas_src>

<mosaic_0001>
module attributes {stable_mosaic.version = 11 : i64} {
  func.func @convnet_kernel(%arg0: i32, %arg1: memref<8x448xbf16, #tpu.memory_space<vmem>>, %arg2: memref<8x448xbf16, #tpu.memory_space<vmem>>, %arg3: memref<448x128xbf16, #tpu.memory_space<vmem>>, %arg4: memref<1x128xf32, #tpu.memory_space<vmem>>, %arg5: memref<128x128xbf16, #tpu.memory_space<vmem>>, %arg6: memref<128x128xbf16, #tpu.memory_space<vmem>>, %arg7: memref<1x128xf32, #tpu.memory_space<vmem>>, %arg8: memref<128x128xbf16, #tpu.memory_space<vmem>>, %arg9: memref<1x128xf32, #tpu.memory_space<vmem>>, %arg10: memref<8x128xf32, #tpu.memory_space<vmem>>) attributes {dimension_semantics = [#tpu.dimension_semantics<parallel>], iteration_bounds = array<i64: 2>, scalar_prefetch = 0 : i64, scratch_operands = 0 : i64, tpu.core_type = #tpu.core_type<tc>, window_params = [{transform_indices = @transform_0, window_bounds = array<i64: 8, 448>}, {transform_indices = @transform_1, window_bounds = array<i64: 8, 448>}, {pipeline_mode = #tpu.pipeline_mode<synchronous>, transform_indices = @transform_2, window_bounds = array<i64: 448, 128>}, {pipeline_mode = #tpu.pipeline_mode<synchronous>, transform_indices = @transform_3, window_bounds = array<i64: 1, 128>}, {pipeline_mode = #tpu.pipeline_mode<synchronous>, transform_indices = @transform_4, window_bounds = array<i64: 128, 128>}, {pipeline_mode = #tpu.pipeline_mode<synchronous>, transform_indices = @transform_5, window_bounds = array<i64: 128, 128>}, {pipeline_mode = #tpu.pipeline_mode<synchronous>, transform_indices = @transform_6, window_bounds = array<i64: 1, 128>}, {pipeline_mode = #tpu.pipeline_mode<synchronous>, transform_indices = @transform_7, window_bounds = array<i64: 128, 128>}, {pipeline_mode = #tpu.pipeline_mode<synchronous>, transform_indices = @transform_8, window_bounds = array<i64: 1, 128>}, {transform_indices = @transform_9, window_bounds = array<i64: 8, 128>}]} {
    %c0 = arith.constant 0 : index
    %c0_0 = arith.constant 0 : index
    %0 = vector.load %arg3[%c0, %c0_0] : memref<448x128xbf16, #tpu.memory_space<vmem>>, vector<448x128xbf16>
    %c0_1 = arith.constant 0 : index
    %c0_2 = arith.constant 0 : index
    %1 = vector.load %arg1[%c0_1, %c0_2] : memref<8x448xbf16, #tpu.memory_space<vmem>>, vector<8x448xbf16>
    %cst = arith.constant dense<0.000000e+00> : vector<8x128xf32>
    %2 = tpu.matmul %1, %0, %cst {dimension_numbers = #tpu.dot_dimension_numbers<[1], [0], [0], [1], [0, 0, 1, 1], [], []>} : vector<8x448xbf16>, vector<448x128xbf16>, vector<8x128xf32> -> vector<8x128xf32>
    %c0_3 = arith.constant 0 : index
    %c0_4 = arith.constant 0 : index
    %3 = vector.load %arg4[%c0_3, %c0_4] : memref<1x128xf32, #tpu.memory_space<vmem>>, vector<1x128xf32>
    %4 = vector.broadcast %3 : vector<1x128xf32> to vector<8x128xf32>
    %5 = arith.addf %2, %4 : vector<8x128xf32>
    %c0_5 = arith.constant 0 : index
    %c0_6 = arith.constant 0 : index
    %6 = vector.load %arg2[%c0_5, %c0_6] : memref<8x448xbf16, #tpu.memory_space<vmem>>, vector<8x448xbf16>
    %cst_7 = arith.constant dense<0.000000e+00> : vector<8x128xf32>
    %7 = tpu.matmul %6, %0, %cst_7 {dimension_numbers = #tpu.dot_dimension_numbers<[1], [0], [0], [1], [0, 0, 1, 1], [], []>} : vector<8x448xbf16>, vector<448x128xbf16>, vector<8x128xf32> -> vector<8x128xf32>
    %c0_8 = arith.constant 0 : index
    %c0_9 = arith.constant 0 : index
    %8 = vector.load %arg4[%c0_8, %c0_9] : memref<1x128xf32, #tpu.memory_space<vmem>>, vector<1x128xf32>
    %9 = vector.broadcast %8 : vector<1x128xf32> to vector<8x128xf32>
    %10 = arith.addf %7, %9 : vector<8x128xf32>
    %11 = arith.mulf %5, %5 : vector<8x128xf32>
    %12 = arith.truncf %11 : vector<8x128xf32> to vector<8x128xbf16>
    %13 = arith.mulf %10, %10 : vector<8x128xf32>
    %14 = arith.truncf %13 : vector<8x128xf32> to vector<8x128xbf16>
    %c0_10 = arith.constant 0 : index
    %c0_11 = arith.constant 0 : index
    %15 = vector.load %arg5[%c0_10, %c0_11] : memref<128x128xbf16, #tpu.memory_space<vmem>>, vector<128x128xbf16>
    %cst_12 = arith.constant dense<0.000000e+00> : vector<8x128xf32>
    %16 = tpu.matmul %12, %15, %cst_12 {dimension_numbers = #tpu.dot_dimension_numbers<[1], [0], [0], [1], [0, 0, 1, 1], [], []>} : vector<8x128xbf16>, vector<128x128xbf16>, vector<8x128xf32> -> vector<8x128xf32>
    %c0_13 = arith.constant 0 : index
    %c0_14 = arith.constant 0 : index
    %17 = vector.load %arg6[%c0_13, %c0_14] : memref<128x128xbf16, #tpu.memory_space<vmem>>, vector<128x128xbf16>
    %cst_15 = arith.constant dense<0.000000e+00> : vector<8x128xf32>
    %18 = tpu.matmul %14, %17, %cst_15 {dimension_numbers = #tpu.dot_dimension_numbers<[1], [0], [0], [1], [0, 0, 1, 1], [], []>} : vector<8x128xbf16>, vector<128x128xbf16>, vector<8x128xf32> -> vector<8x128xf32>
    %19 = arith.addf %16, %18 : vector<8x128xf32>
    %c0_16 = arith.constant 0 : index
    %c0_17 = arith.constant 0 : index
    %20 = vector.load %arg7[%c0_16, %c0_17] : memref<1x128xf32, #tpu.memory_space<vmem>>, vector<1x128xf32>
    %21 = vector.broadcast %20 : vector<1x128xf32> to vector<8x128xf32>
    %22 = arith.addf %19, %21 : vector<8x128xf32>
    %23 = arith.mulf %22, %22 : vector<8x128xf32>
    %24 = arith.truncf %23 : vector<8x128xf32> to vector<8x128xbf16>
    %c0_18 = arith.constant 0 : index
    %c0_19 = arith.constant 0 : index
    %25 = vector.load %arg8[%c0_18, %c0_19] : memref<128x128xbf16, #tpu.memory_space<vmem>>, vector<128x128xbf16>
    %cst_20 = arith.constant dense<0.000000e+00> : vector<8x128xf32>
    %26 = tpu.matmul %24, %25, %cst_20 {dimension_numbers = #tpu.dot_dimension_numbers<[1], [0], [0], [1], [0, 0, 1, 1], [], []>} : vector<8x128xbf16>, vector<128x128xbf16>, vector<8x128xf32> -> vector<8x128xf32>
    %c0_21 = arith.constant 0 : index
    %c0_22 = arith.constant 0 : index
    %27 = vector.load %arg9[%c0_21, %c0_22] : memref<1x128xf32, #tpu.memory_space<vmem>>, vector<1x128xf32>
    %28 = vector.broadcast %27 : vector<1x128xf32> to vector<8x128xf32>
    %29 = arith.addf %26, %28 : vector<8x128xf32>
    %c0_23 = arith.constant 0 : index
    %c0_24 = arith.constant 0 : index
    %30 = vector.load %arg10[%c0_23, %c0_24] : memref<8x128xf32, #tpu.memory_space<vmem>>, vector<8x128xf32>
    tpu.vector_store %arg10[%c0_23, %c0_24], %29 {strides = array<i32>} : memref<8x128xf32, #tpu.memory_space<vmem>>, vector<8x128xf32>,
    return
  }
  func.func @transform_0(%arg0: i32) -> (i32, i32) {
    %c0_i32 = arith.constant 0 : i32
    %c0_i32_0 = arith.constant 0 : i32
    return %arg0, %c0_i32 : i32, i32
  }
  func.func @transform_1(%arg0: i32) -> (i32, i32) {
    %c0_i32 = arith.constant 0 : i32
    %c0_i32_0 = arith.constant 0 : i32
    return %arg0, %c0_i32 : i32, i32
  }
  func.func @transform_2(%arg0: i32) -> (i32, i32) {
    %c0_i32 = arith.constant 0 : i32
    %c0_i32_0 = arith.constant 0 : i32
    %c0_i32_1 = arith.constant 0 : i32
    return %c0_i32, %c0_i32_0 : i32, i32
  }
  func.func @transform_3(%arg0: i32) -> (i32, i32) {
    %c0_i32 = arith.constant 0 : i32
    %c0_i32_0 = arith.constant 0 : i32
    %c0_i32_1 = arith.constant 0 : i32
    return %c0_i32, %c0_i32_0 : i32, i32
  }
  func.func @transform_4(%arg0: i32) -> (i32, i32) {
    %c0_i32 = arith.constant 0 : i32
    %c0_i32_0 = arith.constant 0 : i32
    %c0_i32_1 = arith.constant 0 : i32
    return %c0_i32, %c0_i32_0 : i32, i32
  }
  func.func @transform_5(%arg0: i32) -> (i32, i32) {
    %c0_i32 = arith.constant 0 : i32
    %c0_i32_0 = arith.constant 0 : i32
    %c0_i32_1 = arith.constant 0 : i32
    return %c0_i32, %c0_i32_0 : i32, i32
  }
  func.func @transform_6(%arg0: i32) -> (i32, i32) {
    %c0_i32 = arith.constant 0 : i32
    %c0_i32_0 = arith.constant 0 : i32
    %c0_i32_1 = arith.constant 0 : i32
    return %c0_i32, %c0_i32_0 : i32, i32
  }
  func.func @transform_7(%arg0: i32) -> (i32, i32) {
    %c0_i32 = arith.constant 0 : i32
    %c0_i32_0 = arith.constant 0 : i32
    %c0_i32_1 = arith.constant 0 : i32
    return %c0_i32, %c0_i32_0 : i32, i32
  }
  func.func @transform_8(%arg0: i32) -> (i32, i32) {
    %c0_i32 = arith.constant 0 : i32
    %c0_i32_0 = arith.constant 0 : i32
    %c0_i32_1 = arith.constant 0 : i32
    return %c0_i32, %c0_i32_0 : i32, i32
  }
  func.func @transform_9(%arg0: i32) -> (i32, i32) {
    %c0_i32 = arith.constant 0 : i32
    %c0_i32_0 = arith.constant 0 : i32
    return %arg0, %c0_i32 : i32, i32
  }
}

</mosaic_0001>

<llo_original>
// kernel: convnet_forward.1
$region0: #{convnet_forward.1}
  #allocation0 [shape = 'u32[]', space=smem, size = 0x4, offset = 0x4, fixed_abs, tag = 'smem constant byte address 0x4 - core index']
  #allocation1 [shape = 'u32[144,128]{1,0:T(1,128)}', space=vmem, size = 0x12000, scoped, tag = 'internal scratch']
  %s0 = inlined_call_operand.vmem [shape: bf16[16,448], index: 0, kind: input, shape index: {}]
  %s1 = inlined_call_operand.vmem [shape: bf16[16,448], index: 1, kind: input, shape index: {}]
  %s2 = inlined_call_operand.vmem [shape: bf16[448,128], index: 2, kind: input, shape index: {}]
  %s3 = inlined_call_operand.vmem [shape: f32[1,128], index: 3, kind: input, shape index: {}]
  %s4 = inlined_call_operand.vmem [shape: bf16[128,128], index: 4, kind: input, shape index: {}]
  %s5 = inlined_call_operand.vmem [shape: bf16[128,128], index: 5, kind: input, shape index: {}]
  %s6 = inlined_call_operand.vmem [shape: f32[1,128], index: 6, kind: input, shape index: {}]
  %s7 = inlined_call_operand.vmem [shape: bf16[128,128], index: 7, kind: input, shape index: {}]
  %s8 = inlined_call_operand.vmem [shape: f32[1,128], index: 8, kind: input, shape index: {}]
  %s9 = inlined_call_operand.vmem [shape: f32[16,128], index: 9, kind: output, shape index: {}]
  %s10 = sld [smem:[#allocation0]]
  $region69: #{convnet_forward.1} parent=0
    _
  %s12 = ssub.s32 1, %s10
  %s13 = scalar_select 0, %s12, %s10
  loop: start=0, step=1, limit=4
  $region2: #{convnet_forward.1} parent=0 // loop_pre_header
    _
  $region3: #{convnet_forward.1} parent=0 // loop_header
    %s15 = sphi 0, %s19
    %p16 = scmp.ge.s32.totalorder %s15, 4
    %s25 = sphi 0, %s27
    %s28 = sphi 0, %s25
    %s29 = sphi 0, %s28
    %s45 = sphi 0, %s29
    %s51 = sphi 0, %s53
    %s54 = sphi 0, %s51
    %s55 = sphi 0, %s54
    %s71 = sphi 0, %s55
    %s75 = sphi 0, %s75
    %s77 = sphi 0, %s75
    %s78 = sphi 0, %s77
    %s92 = sphi 0, %s78
    %s96 = sphi 0, %s96
    %s98 = sphi 0, %s96
    %s99 = sphi 0, %s98
    %s113 = sphi 0, %s99
    %s117 = sphi 0, %s117
    %s119 = sphi 0, %s117
    %s120 = sphi 0, %s119
    %s134 = sphi 0, %s120
    %s138 = sphi 0, %s138
    %s140 = sphi 0, %s138
    %s141 = sphi 0, %s140
    %s155 = sphi 0, %s141
    %s159 = sphi 0, %s159
    %s161 = sphi 0, %s159
    %s162 = sphi 0, %s161
    %s176 = sphi 0, %s162
    %s180 = sphi 0, %s180
    %s182 = sphi 0, %s180
    %s183 = sphi 0, %s182
    %s197 = sphi 0, %s183
    %s201 = sphi 0, %s201
    %s203 = sphi 0, %s201
    %s204 = sphi 0, %s203
    %s218 = sphi 0, %s204
    %s224 = sphi 0, %s226
    %s227 = sphi 0, %s224
    %s228 = sphi 0, %s227
    %s244 = sphi 0, %s228
  $region4: #{convnet_forward.1} parent=0 // loop_header_branch
    %18 = sbr.rel (%p16) target = $region8
  $region5: #{convnet_forward.1} parent=0 // loop_body
    %s20 = ssub.s32 %s15, 1
    %s21 = ssub.s32 %s15, 2
    %s22 = sadd.s32 %s15, 1
    %s23 = ssub.s32 %s15, %s22
    %p24 = scmp.eq.s32.totalorder %s23, 0
    %s26 = sadd.s32 %s25, 1
    %s27 = scalar_select %p24, %s25, %s26
    %p30 = pneg %p24
    %p31 = scmp.eq.s32.totalorder %s15, 1
    %p32 = por %p30, %p31
    %p33 = scmp.ne.s32.totalorder %s25, %s28
    %p34 = scmp.eq.s32.totalorder %s15, 0
    %p35 = por %p33, %p34
    %p36 = scmp.ne.s32.totalorder %s25, %s28
    %p37 = scmp.eq.s32.totalorder %s20, 1
    %p38 = por %p36, %p37
    %p39 = scmp.ne.s32.totalorder %s28, %s29
    %p40 = scmp.eq.s32.totalorder %s20, 0
    %p41 = por %p39, %p40
    %p42 = scmp.ne.s32.totalorder %s28, %s29
    %p43 = scmp.eq.s32.totalorder %s21, 1
    %p44 = por %p42, %p43
    %p46 = scmp.ne.s32.totalorder %s29, %s45
    %p47 = scmp.eq.s32.totalorder %s21, 0
    %p48 = por %p46, %p47
    %s49 = ssub.s32 %s15, %s22
    %p50 = scmp.eq.s32.totalorder %s49, 0
    %s52 = sadd.s32 %s51, 1
    %s53 = scalar_select %p50, %s51, %s52
    %p56 = pneg %p50
    %p57 = scmp.eq.s32.totalorder %s15, 1
    %p58 = por %p56, %p57
    %p59 = scmp.ne.s32.totalorder %s51, %s54
    %p60 = scmp.eq.s32.totalorder %s15, 0
    %p61 = por %p59, %p60
    %p62 = scmp.ne.s32.totalorder %s51, %s54
    %p63 = scmp.eq.s32.totalorder %s20, 1
    %p64 = por %p62, %p63
    %p65 = scmp.ne.s32.totalorder %s54, %s55
    %p66 = scmp.eq.s32.totalorder %s20, 0
    %p67 = por %p65, %p66
    %p68 = scmp.ne.s32.totalorder %s54, %s55
    %p69 = scmp.eq.s32.totalorder %s21, 1
    %p70 = por %p68, %p69
    %p72 = scmp.ne.s32.totalorder %s55, %s71
    %p73 = scmp.eq.s32.totalorder %s21, 0
    %p74 = por %p72, %p73
    %s76 = sadd.s32 %s75, 1
    %p79 = scmp.eq.s32.totalorder %s15, 1
    %p80 = scmp.ne.s32.totalorder %s75, %s77
    %p81 = scmp.eq.s32.totalorder %s15, 0
    %p82 = por %p80, %p81
    %p83 = scmp.ne.s32.totalorder %s75, %s77
    %p84 = scmp.eq.s32.totalorder %s20, 1
    %p85 = por %p83, %p84
    %p86 = scmp.ne.s32.totalorder %s77, %s78
    %p87 = scmp.eq.s32.totalorder %s20, 0
    %p88 = por %p86, %p87
    %p89 = scmp.ne.s32.totalorder %s77, %s78
    %p90 = scmp.eq.s32.totalorder %s21, 1
    %p91 = por %p89, %p90
    %p93 = scmp.ne.s32.totalorder %s78, %s92
    %p94 = scmp.eq.s32.totalorder %s21, 0
    %p95 = por %p93, %p94
    %s97 = sadd.s32 %s96, 1
    %p100 = scmp.eq.s32.totalorder %s15, 1
    %p101 = scmp.ne.s32.totalorder %s96, %s98
    %p102 = scmp.eq.s32.totalorder %s15, 0
    %p103 = por %p101, %p102
    %p104 = scmp.ne.s32.totalorder %s96, %s98
    %p105 = scmp.eq.s32.totalorder %s20, 1
    %p106 = por %p104, %p105
    %p107 = scmp.ne.s32.totalorder %s98, %s99
    %p108 = scmp.eq.s32.totalorder %s20, 0
    %p109 = por %p107, %p108
    %p110 = scmp.ne.s32.totalorder %s98, %s99
    %p111 = scmp.eq.s32.totalorder %s21, 1
    %p112 = por %p110, %p111
    %p114 = scmp.ne.s32.totalorder %s99, %s113
    %p115 = scmp.eq.s32.totalorder %s21, 0
    %p116 = por %p114, %p115
    %s118 = sadd.s32 %s117, 1
    %p121 = scmp.eq.s32.totalorder %s15, 1
    %p122 = scmp.ne.s32.totalorder %s117, %s119
    %p123 = scmp.eq.s32.totalorder %s15, 0
    %p124 = por %p122, %p123
    %p125 = scmp.ne.s32.totalorder %s117, %s119
    %p126 = scmp.eq.s32.totalorder %s20, 1
    %p127 = por %p125, %p126
    %p128 = scmp.ne.s32.totalorder %s119, %s120
    %p129 = scmp.eq.s32.totalorder %s20, 0
    %p130 = por %p128, %p129
    %p131 = scmp.ne.s32.totalorder %s119, %s120
    %p132 = scmp.eq.s32.totalorder %s21, 1
    %p133 = por %p131, %p132
    %p135 = scmp.ne.s32.totalorder %s120, %s134
    %p136 = scmp.eq.s32.totalorder %s21, 0
    %p137 = por %p135, %p136
    %s139 = sadd.s32 %s138, 1
    %p142 = scmp.eq.s32.totalorder %s15, 1
    %p143 = scmp.ne.s32.totalorder %s138, %s140
    %p144 = scmp.eq.s32.totalorder %s15, 0
    %p145 = por %p143, %p144
    %p146 = scmp.ne.s32.totalorder %s138, %s140
    %p147 = scmp.eq.s32.totalorder %s20, 1
    %p148 = por %p146, %p147
    %p149 = scmp.ne.s32.totalorder %s140, %s141
    %p150 = scmp.eq.s32.totalorder %s20, 0
    %p151 = por %p149, %p150
    %p152 = scmp.ne.s32.totalorder %s140, %s141
    %p153 = scmp.eq.s32.totalorder %s21, 1
    %p154 = por %p152, %p153
    %p156 = scmp.ne.s32.totalorder %s141, %s155
    %p157 = scmp.eq.s32.totalorder %s21, 0
    %p158 = por %p156, %p157
    %s160 = sadd.s32 %s159, 1
    %p163 = scmp.eq.s32.totalorder %s15, 1
    %p164 = scmp.ne.s32.totalorder %s159, %s161
    %p165 = scmp.eq.s32.totalorder %s15, 0
    %p166 = por %p164, %p165
    %p167 = scmp.ne.s32.totalorder %s159, %s161
    %p168 = scmp.eq.s32.totalorder %s20, 1
    %p169 = por %p167, %p168
    %p170 = scmp.ne.s32.totalorder %s161, %s162
    %p171 = scmp.eq.s32.totalorder %s20, 0
    %p172 = por %p170, %p171
    %p173 = scmp.ne.s32.totalorder %s161, %s162
    %p174 = scmp.eq.s32.totalorder %s21, 1
    %p175 = por %p173, %p174
    %p177 = scmp.ne.s32.totalorder %s162, %s176
    %p178 = scmp.eq.s32.totalorder %s21, 0
    %p179 = por %p177, %p178
    %s181 = sadd.s32 %s180, 1
    %p184 = scmp.eq.s32.totalorder %s15, 1
    %p185 = scmp.ne.s32.totalorder %s180, %s182
    %p186 = scmp.eq.s32.totalorder %s15, 0
    %p187 = por %p185, %p186
    %p188 = scmp.ne.s32.totalorder %s180, %s182
    %p189 = scmp.eq.s32.totalorder %s20, 1
    %p190 = por %p188, %p189
    %p191 = scmp.ne.s32.totalorder %s182, %s183
    %p192 = scmp.eq.s32.totalorder %s20, 0
    %p193 = por %p191, %p192
    %p194 = scmp.ne.s32.totalorder %s182, %s183
    %p195 = scmp.eq.s32.totalorder %s21, 1
    %p196 = por %p194, %p195
    %p198 = scmp.ne.s32.totalorder %s183, %s197
    %p199 = scmp.eq.s32.totalorder %s21, 0
    %p200 = por %p198, %p199
    %s202 = sadd.s32 %s201, 1
    %p205 = scmp.eq.s32.totalorder %s15, 1
    %p206 = scmp.ne.s32.totalorder %s201, %s203
    %p207 = scmp.eq.s32.totalorder %s15, 0
    %p208 = por %p206, %p207
    %p209 = scmp.ne.s32.totalorder %s201, %s203
    %p210 = scmp.eq.s32.totalorder %s20, 1
    %p211 = por %p209, %p210
    %p212 = scmp.ne.s32.totalorder %s203, %s204
    %p213 = scmp.eq.s32.totalorder %s20, 0
    %p214 = por %p212, %p213
    %p215 = scmp.ne.s32.totalorder %s203, %s204
    %p216 = scmp.eq.s32.totalorder %s21, 1
    %p217 = por %p215, %p216
    %p219 = scmp.ne.s32.totalorder %s204, %s218
    %p220 = scmp.eq.s32.totalorder %s21, 0
    %p221 = por %p219, %p220
    %s222 = ssub.s32 %s15, %s22
    %p223 = scmp.eq.s32.totalorder %s222, 0
    %s225 = sadd.s32 %s224, 1
    %s226 = scalar_select %p223, %s224, %s225
    %p229 = pneg %p223
    %p230 = scmp.eq.s32.totalorder %s15, 1
    %p231 = por %p229, %p230
    %p232 = scmp.ne.s32.totalorder %s224, %s227
    %p233 = scmp.eq.s32.totalorder %s15, 0
    %p234 = por %p232, %p233
    %p235 = scmp.ne.s32.totalorder %s224, %s227
    %p236 = scmp.eq.s32.totalorder %s20, 1
    %p237 = por %p235, %p236
    %p238 = scmp.ne.s32.totalorder %s227, %s228
    %p239 = scmp.eq.s32.totalorder %s20, 0
    %p240 = por %p238, %p239
    %p241 = scmp.ne.s32.totalorder %s227, %s228
    %p242 = scmp.eq.s32.totalorder %s21, 1
    %p243 = por %p241, %p242
    %p245 = scmp.ne.s32.totalorder %s228, %s244
    %p246 = scmp.eq.s32.totalorder %s21, 0
    %p247 = por %p245, %p246
    %p248 = scmp.le.s32.totalorder 1, %s15
    %p249 = scmp.lt.s32.totalorder %s15, 3
    %p250 = pnand %p248, %p249
    %p251 = pneg %p250
    // Predicated region
    $region9: #{convnet_forward.1} parent=5 // pred_check
      _
    $region10: #{convnet_forward.1} parent=5 // pred_check_branch
      %253 = sbr.rel (%p250) target = $region12
    $region11: #{convnet_forward.1} parent=5 // pred_region
      %s254 = ssub.s32 %s15, 1
      // Predicated region
      $region13: #{convnet_forward.1} parent=11 // pred_check
        %p255 = pneg %p88
      $region14: #{convnet_forward.1} parent=11 // pred_check_branch
        %257 = sbr.rel (%p255) target = $region16
      $region15: #{convnet_forward.1} parent=11 // pred_region
        _
      $region16: #{convnet_forward.1} parent=11 // pred_fallthru
        _
      // Predicated region
      $region17: #{convnet_forward.1} parent=11 // pred_check
        %p258 = pneg %p109
      $region18: #{convnet_forward.1} parent=11 // pred_check_branch
        %260 = sbr.rel (%p258) target = $region20
      $region19: #{convnet_forward.1} parent=11 // pred_region
        _
      $region20: #{convnet_forward.1} parent=11 // pred_fallthru
        _
      // Predicated region
      $region21: #{convnet_forward.1} parent=11 // pred_check
        %p261 = pneg %p130
      $region22: #{convnet_forward.1} parent=11 // pred_check_branch
        %263 = sbr.rel (%p261) target = $region24
      $region23: #{convnet_forward.1} parent=11 // pred_region
        _
      $region24: #{convnet_forward.1} parent=11 // pred_fallthru
        _
      // Predicated region
      $region25: #{convnet_forward.1} parent=11 // pred_check
        %p264 = pneg %p151
      $region26: #{convnet_forward.1} parent=11 // pred_check_branch
        %266 = sbr.rel (%p264) target = $region28
      $region27: #{convnet_forward.1} parent=11 // pred_region
        _
      $region28: #{convnet_forward.1} parent=11 // pred_fallthru
        _
      // Predicated region
      $region29: #{convnet_forward.1} parent=11 // pred_check
        %p267 = pneg %p172
      $region30: #{convnet_forward.1} parent=11 // pred_check_branch
        %269 = sbr.rel (%p267) target = $region32
      $region31: #{convnet_forward.1} parent=11 // pred_region
        _
      $region32: #{convnet_forward.1} parent=11 // pred_fallthru
        _
      // Predicated region
      $region33: #{convnet_forward.1} parent=11 // pred_check
        %p270 = pneg %p193
      $region34: #{convnet_forward.1} parent=11 // pred_check_branch
        %272 = sbr.rel (%p270) target = $region36
      $region35: #{convnet_forward.1} parent=11 // pred_region
        _
      $region36: #{convnet_forward.1} parent=11 // pred_fallthru
        _
      // Predicated region
      $region37: #{convnet_forward.1} parent=11 // pred_check
        %p273 = pneg %p214
      $region38: #{convnet_forward.1} parent=11 // pred_check_branch
        %275 = sbr.rel (%p273) target = $region40
      $region39: #{convnet_forward.1} parent=11 // pred_region
        _
      $region40: #{convnet_forward.1} parent=11 // pred_fallthru
        _
    $region12: #{convnet_forward.1} parent=5 // pred_fallthru
      _
    %p276 = scmp.lt.s32.totalorder %s15, 2
    // Predicated region
    $region41: #{convnet_forward.1} parent=5 // pred_check
      %p277 = pneg %p276
    $region42: #{convnet_forward.1} parent=5 // pred_check_branch
      %279 = sbr.rel (%p277) target = $region44
    $region43: #{convnet_forward.1} parent=5 // pred_region
      // Predicated region
      $region45: #{convnet_forward.1} parent=43 // pred_check
        %p280 = pneg %p35
      $region46: #{convnet_forward.1} parent=43 // pred_check_branch
        %282 = sbr.rel (%p280) target = $region48
      $region47: #{convnet_forward.1} parent=43 // pred_region
        %p283 = scmp.lt.s32.totalorder %s15, 1
        %s284 = scalar_select %p283, %s15, 1
        %s285 = smul.addr %s284, 4
        %s286 = smul.addr %s285, 4
        %s287 = scalar_lea.vmem %s0, %s286
      $region48: #{convnet_forward.1} parent=43 // pred_fallthru
        _
      // Predicated region
      $region49: #{convnet_forward.1} parent=43 // pred_check
        %p288 = pneg %p61
      $region50: #{convnet_forward.1} parent=43 // pred_check_branch
        %290 = sbr.rel (%p288) target = $region52
      $region51: #{convnet_forward.1} parent=43 // pred_region
        %p291 = scmp.lt.s32.totalorder %s15, 1
        %s292 = scalar_select %p291, %s15, 1
        %s293 = smul.addr %s292, 4
        %s294 = smul.addr %s293, 4
        %s295 = scalar_lea.vmem %s1, %s294
      $region52: #{convnet_forward.1} parent=43 // pred_fallthru
        _
    $region44: #{convnet_forward.1} parent=5 // pred_fallthru
      _
    %p296 = scmp.le.s32.totalorder 1, %s15
    %p297 = scmp.lt.s32.totalorder %s15, 3
    %p298 = pnand %p296, %p297
    %p299 = pneg %p298
    // Predicated region
    $region53: #{convnet_forward.1} parent=5 // pred_check
      _
    $region54: #{convnet_forward.1} parent=5 // pred_check_branch
      %301 = sbr.rel (%p298) target = $region56
    $region55: #{convnet_forward.1} parent=5 // pred_region
      %s302 = ssub.s32 %s15, 1
      %p303 = scmp.lt.s32.totalorder %s20, 1
      %s304 = scalar_select %p303, %s20, 1
      %s305 = smul.addr %s304, 4
      %s306 = smul.addr %s305, 4
      %s307 = scalar_lea.vmem %s0, %s306
      %p308 = pneg %p41
      %p309 = pneg %p38
      %p310 = scmp.lt.s32.totalorder %s20, 1
      %s311 = scalar_select %p310, %s20, 1
      %s312 = smul.addr %s311, 4
      %s313 = smul.addr %s312, 4
      %s314 = scalar_lea.vmem %s1, %s313
      %p315 = pneg %p67
      %p316 = pneg %p64
      %p317 = pneg %p88
      %p318 = pneg %p85
      %p319 = pneg %p109
      %p320 = pneg %p106
      %p321 = pneg %p130
      %p322 = pneg %p127
      %p323 = pneg %p151
      %p324 = pneg %p148
      %p325 = pneg %p172
      %p326 = pneg %p169
      %p327 = pneg %p193
      %p328 = pneg %p190
      %p329 = pneg %p214
      %p330 = pneg %p211
      %p331 = pneg %p240
      %p332 = pneg %p237
      %p333 = scmp.lt.s32.totalorder %s20, 1
      %s334 = scalar_select %p333, %s20, 1
      %s335 = smul.addr %s334, 8
      %s336 = scalar_lea.vmem %s9, %s335
      %p337 = scmp.lt.s32.totalorder %s20, 1
      %s338 = scalar_select %p337, %s20, 1
      %s339 = smul.addr %s338, 4
      %s340 = smul.addr %s339, 4
      %s341 = scalar_lea.vmem %s0, %s340
      %p342 = scmp.lt.s32.totalorder %s20, 1
      %s343 = scalar_select %p342, %s20, 1
      %s344 = smul.addr %s343, 4
      %s345 = smul.addr %s344, 4
      %s346 = scalar_lea.vmem %s1, %s345
      %p347 = scmp.lt.s32.totalorder %s20, 1
      %s348 = scalar_select %p347, %s20, 1
      %s349 = smul.addr %s348, 8
      %s350 = scalar_lea.vmem %s9, %s349
      %v352 = vld [vmem:[%s2] sm:$0xf]
      %v353 = vld [vmem:[%s2 + $0x4] sm:$0xf]
      %v354 = vld [vmem:[%s2 + $0x8] sm:$0xf]
      %v355 = vld [vmem:[%s2 + $0xc] sm:$0xf]
      %v356 = vld [vmem:[%s2 + $0x10] sm:$0xf]
      %v357 = vld [vmem:[%s2 + $0x14] sm:$0xf]
      %v358 = vld [vmem:[%s2 + $0x18] sm:$0xf]
      %v359 = vld [vmem:[%s2 + $0x1c] sm:$0xf]
      %v360 = vld [vmem:[%s2 + $0x20] sm:$0xf]
      %v361 = vld [vmem:[%s2 + $0x24] sm:$0xf]
      %v362 = vld [vmem:[%s2 + $0x28] sm:$0xf]
      %v363 = vld [vmem:[%s2 + $0x2c] sm:$0xf]
      %v364 = vld [vmem:[%s2 + $0x30] sm:$0xf]
      %v365 = vld [vmem:[%s2 + $0x34] sm:$0xf]
      %v366 = vld [vmem:[%s2 + $0x38] sm:$0xf]
      %v367 = vld [vmem:[%s2 + $0x3c] sm:$0xf]
      %v368 = vld [vmem:[%s2 + $0x40] sm:$0xf]
      %v369 = vld [vmem:[%s2 + $0x44] sm:$0xf]
      %v370 = vld [vmem:[%s2 + $0x48] sm:$0xf]
      %v371 = vld [vmem:[%s2 + $0x4c] sm:$0xf]
      %v372 = vld [vmem:[%s2 + $0x50] sm:$0xf]
      %v373 = vld [vmem:[%s2 + $0x54] sm:$0xf]
      %v374 = vld [vmem:[%s2 + $0x58] sm:$0xf]
      %v375 = vld [vmem:[%s2 + $0x5c] sm:$0xf]
      %v376 = vld [vmem:[%s2 + $0x60] sm:$0xf]
      %v377 = vld [vmem:[%s2 + $0x64] sm:$0xf]
      %v378 = vld [vmem:[%s2 + $0x68] sm:$0xf]
      %v379 = vld [vmem:[%s2 + $0x6c] sm:$0xf]
      %v380 = vld [vmem:[%s2 + $0x70] sm:$0xf]
      %v381 = vld [vmem:[%s2 + $0x74] sm:$0xf]
      %v382 = vld [vmem:[%s2 + $0x78] sm:$0xf]
      %v383 = vld [vmem:[%s2 + $0x7c] sm:$0xf]
      %v384 = vld [vmem:[%s2 + $0x80] sm:$0xf]
      %v385 = vld [vmem:[%s2 + $0x84] sm:$0xf]
      %v386 = vld [vmem:[%s2 + $0x88] sm:$0xf]
      %v387 = vld [vmem:[%s2 + $0x8c] sm:$0xf]
      %v388 = vld [vmem:[%s2 + $0x90] sm:$0xf]
      %v389 = vld [vmem:[%s2 + $0x94] sm:$0xf]
      %v390 = vld [vmem:[%s2 + $0x98] sm:$0xf]
      %v391 = vld [vmem:[%s2 + $0x9c] sm:$0xf]
      %v392 = vld [vmem:[%s2 + $0xa0] sm:$0xf]
      %v393 = vld [vmem:[%s2 + $0xa4] sm:$0xf]
      %v394 = vld [vmem:[%s2 + $0xa8] sm:$0xf]
      %v395 = vld [vmem:[%s2 + $0xac] sm:$0xf]
      %v396 = vld [vmem:[%s2 + $0xb0] sm:$0xf]
      %v397 = vld [vmem:[%s2 + $0xb4] sm:$0xf]
      %v398 = vld [vmem:[%s2 + $0xb8] sm:$0xf]
      %v399 = vld [vmem:[%s2 + $0xbc] sm:$0xf]
      %v400 = vld [vmem:[%s2 + $0xc0] sm:$0xf]
      %v401 = vld [vmem:[%s2 + $0xc4] sm:$0xf]
      %v402 = vld [vmem:[%s2 + $0xc8] sm:$0xf]
      %v403 = vld [vmem:[%s2 + $0xcc] sm:$0xf]
      %v404 = vld [vmem:[%s2 + $0xd0] sm:$0xf]
      %v405 = vld [vmem:[%s2 + $0xd4] sm:$0xf]
      %v406 = vld [vmem:[%s2 + $0xd8] sm:$0xf]
      %v407 = vld [vmem:[%s2 + $0xdc] sm:$0xf]
      %v408 = vld [vmem:[%s341] sm:$0xff]
      %v409 = vld [vmem:[%s341 + $0x8] sm:$0xff]
      %v410 = vld [vmem:[%s3] sm:$0x1]
      %v412 = vlaneseq
      %v413 = vshrl.u32 %v412, 7
      %v414 = vsub.s32 0, %v413
      %v415 = vrot.slane %v410, %v414
      %v419 = vunpack.c.l.b16 %v408
      %v420 = vunpack.c.h.b16 %v408
      %v421 = vunpack.c.l.b16 %v409
      %v422 = vunpack.c.h.b16 %v409
      %v423 = vpack.c.b16 %v419, %v419
      %v424 = vpack.c.b16 %v420, %v420
      %v425 = vpack.c.b16 %v421, %v421
      %v426 = vpack.c.b16 %v422, %v422
      %v486 = vunpack.c.l.b16 %v352
      %v487 = vunpack.c.l.b16 %v353
      %v488 = vunpack.c.l.b16 %v354
      %v489 = vunpack.c.l.b16 %v355
      %v490 = vunpack.c.l.b16 %v356
      %v491 = vunpack.c.l.b16 %v357
      %v492 = vunpack.c.l.b16 %v358
      %v493 = vunpack.c.l.b16 %v359
      %v494 = vunpack.c.l.b16 %v360
      %v495 = vunpack.c.l.b16 %v361
      %v496 = vunpack.c.l.b16 %v362
      %v497 = vunpack.c.l.b16 %v363
      %v498 = vunpack.c.l.b16 %v364
      %v499 = vunpack.c.l.b16 %v365
      %v500 = vunpack.c.l.b16 %v366
      %v501 = vunpack.c.l.b16 %v367
      %v502 = vunpack.c.l.b16 %v368
      %v503 = vunpack.c.l.b16 %v369
      %v504 = vunpack.c.l.b16 %v370
      %v505 = vunpack.c.l.b16 %v371
      %v506 = vunpack.c.l.b16 %v372
      %v507 = vunpack.c.l.b16 %v373
      %v508 = vunpack.c.l.b16 %v374
      %v509 = vunpack.c.l.b16 %v375
      %v510 = vunpack.c.l.b16 %v376
      %v511 = vunpack.c.l.b16 %v377
      %v512 = vunpack.c.l.b16 %v378
      %v513 = vunpack.c.l.b16 %v379
      %v514 = vunpack.c.l.b16 %v380
      %v515 = vunpack.c.l.b16 %v381
      %v516 = vunpack.c.l.b16 %v382
      %v517 = vunpack.c.l.b16 %v383
      %v518 = vunpack.c.l.b16 %v384
      %v519 = vunpack.c.l.b16 %v385
      %v520 = vunpack.c.l.b16 %v386
      %v521 = vunpack.c.l.b16 %v387
      %v522 = vunpack.c.l.b16 %v388
      %v523 = vunpack.c.l.b16 %v389
      %v524 = vunpack.c.l.b16 %v390
      %v525 = vunpack.c.l.b16 %v391
      %v526 = vunpack.c.l.b16 %v392
      %v527 = vunpack.c.l.b16 %v393
      %v528 = vunpack.c.l.b16 %v394
      %v529 = vunpack.c.l.b16 %v395
      %v530 = vunpack.c.l.b16 %v396
      %v531 = vunpack.c.l.b16 %v397
      %v532 = vunpack.c.l.b16 %v398
      %v533 = vunpack.c.l.b16 %v399
      %v534 = vunpack.c.l.b16 %v400
      %v535 = vunpack.c.l.b16 %v401
      %v536 = vunpack.c.l.b16 %v402
      %v537 = vunpack.c.l.b16 %v403
      %v538 = vunpack.c.l.b16 %v404
      %v539 = vunpack.c.l.b16 %v405
      %v540 = vunpack.c.l.b16 %v406
      %v541 = vunpack.c.l.b16 %v407
      %v542 = vpack.c.b16 %v487, %v486
      %v543 = vpack.c.b16 %v489, %v488
      %v544 = vpack.c.b16 %v491, %v490
      %v545 = vpack.c.b16 %v493, %v492
      %v546 = vpack.c.b16 %v495, %v494
      %v547 = vpack.c.b16 %v497, %v496
      %v548 = vpack.c.b16 %v499, %v498
      %v549 = vpack.c.b16 %v501, %v500
      %v550 = vpack.c.b16 %v503, %v502
      %v551 = vpack.c.b16 %v505, %v504
      %v552 = vpack.c.b16 %v507, %v506
      %v553 = vpack.c.b16 %v509, %v508
      %v554 = vpack.c.b16 %v511, %v510
      %v555 = vpack.c.b16 %v513, %v512
      %v556 = vpack.c.b16 %v515, %v514
      %v557 = vpack.c.b16 %v517, %v516
      %v558 = vpack.c.b16 %v519, %v518
      %v559 = vpack.c.b16 %v521, %v520
      %v560 = vpack.c.b16 %v523, %v522
      %v561 = vpack.c.b16 %v525, %v524
      %v562 = vpack.c.b16 %v527, %v526
      %v563 = vpack.c.b16 %v529, %v528
      %v564 = vpack.c.b16 %v531, %v530
      %v565 = vpack.c.b16 %v533, %v532
      %v566 = vpack.c.b16 %v535, %v534
      %v567 = vpack.c.b16 %v537, %v536
      %v568 = vpack.c.b16 %v539, %v538
      %v569 = vpack.c.b16 %v541, %v540
      %vm598 = vcmask 523264
      %v600 = vsel %vm598, %v426, 0
      %602 = vmatprep.subr.bf16.mxu0 0
      %603 = vmatpush1.bf16.msra.mxu0 %v542
      %604 = vmatprep.subr.bf16.mxu0 0
      %605 = vmatpush1.bf16.msra.mxu0 %v543
      %606 = vmatprep.subr.bf16.mxu0 0
      %607 = vmatpush1.bf16.msra.mxu0 %v544
      %608 = vmatprep.subr.bf16.mxu0 0
      %609 = vmatpush1.bf16.msra.mxu0 %v545
      %610 = vmatprep.subr.bf16.mxu0 0
      %611 = vmatpush1.bf16.msra.mxu0 %v546
      %612 = vmatprep.subr.bf16.mxu0 0
      %613 = vmatpush1.bf16.msra.mxu0 %v547
      %614 = vmatprep.subr.bf16.mxu0 0
      %615 = vmatpush1.bf16.msra.mxu0 %v548
      %616 = vmatprep.subr.bf16.mxu0 0
      %617 = vmatpush1.bf16.msra.mxu0 %v549
      %618 = vmatprep.subr.bf16.mxu0 0
      %619 = vmatpush1.bf16.msra.mxu0 %v550
      %620 = vmatprep.subr.bf16.mxu0 0
      %621 = vmatpush1.bf16.msra.mxu0 %v551
      %622 = vmatprep.subr.bf16.mxu0 0
      %623 = vmatpush1.bf16.msra.mxu0 %v552
      %624 = vmatprep.subr.bf16.mxu0 0
      %625 = vmatpush1.bf16.msra.mxu0 %v553
      %626 = vmatprep.subr.bf16.mxu0 0
      %627 = vmatpush1.bf16.msra.mxu0 %v554
      %628 = vmatprep.subr.bf16.mxu0 0
      %629 = vmatpush1.bf16.msra.mxu0 %v555
      %630 = vmatprep.subr.bf16.mxu0 0
      %631 = vmatpush1.bf16.msra.mxu0 %v556
      %632 = vmatprep.subr.bf16.mxu0 0
      %633 = vmatpush1.bf16.msra.mxu0 %v557
      %634 = vmatprep.mubr.bf16.mxu0 %v424
      %635 = vmatmul.mubr.bf16.gmra.mrb[0].mxu0 %v423
      %v636 = vpop.f32.mrb[0].mxu0
      %v637 = vadd.f32 %v415, %v636
      %v638 = vpop.f32.mrb[0].mxu0
      %v639 = vpop.f32.mrb[0].mxu0
      %v640 = vpop.f32.mrb[0].mxu0
      %641 = vdwg.mxu0
      %642 = vmatprep.subr.bf16.mxu0 0
      %643 = vmatpush1.bf16.msra.mxu0 %v558
      %644 = vmatprep.subr.bf16.mxu0 0
      %645 = vmatpush1.bf16.msra.mxu0 %v559
      %646 = vmatprep.subr.bf16.mxu0 0
      %647 = vmatpush1.bf16.msra.mxu0 %v560
      %648 = vmatprep.subr.bf16.mxu0 0
      %649 = vmatpush1.bf16.msra.mxu0 %v561
      %650 = vmatprep.subr.bf16.mxu0 0
      %651 = vmatpush1.bf16.msra.mxu0 %v562
      %652 = vmatprep.subr.bf16.mxu0 0
      %653 = vmatpush1.bf16.msra.mxu0 %v563
      %654 = vmatprep.subr.bf16.mxu0 0
      %655 = vmatpush1.bf16.msra.mxu0 %v564
      %656 = vmatprep.subr.bf16.mxu0 0
      %657 = vmatpush1.bf16.msra.mxu0 %v565
      %658 = vmatprep.subr.bf16.mxu0 0
      %659 = vmatpush1.bf16.msra.mxu0 %v566
      %660 = vmatprep.subr.bf16.mxu0 0
      %661 = vmatpush1.bf16.msra.mxu0 %v567
      %662 = vmatprep.subr.bf16.mxu0 0
      %663 = vmatpush1.bf16.msra.mxu0 %v568
      %664 = vmatprep.subr.bf16.mxu0 0
      %665 = vmatpush1.bf16.msra.mxu0 %v569
      %666 = vmatprep.subr.bf16.mxu0 0
      %667 = vmatpush1.bf16.msra.mxu0 0
      %668 = vmatprep.subr.bf16.mxu0 0
      %669 = vmatpush1.bf16.msra.mxu0 0
      %670 = vmatprep.subr.bf16.mxu0 0
      %671 = vmatpush1.bf16.msra.mxu0 0
      %672 = vmatprep.subr.bf16.mxu0 0
      %673 = vmatpush1.bf16.msra.mxu0 0
      %674 = vmatprep.mubr.bf16.mxu0 %v600
      %675 = vmatmul.mubr.bf16.gmra.mrb[0].mxu0 %v425
      %v676 = vpop.f32.mrb[0].mxu0
      %v677 = vadd.f32 %v637, %v676
      %v678 = vpop.f32.mrb[0].mxu0
      %v679 = vpop.f32.mrb[0].mxu0
      %v680 = vpop.f32.mrb[0].mxu0
      %681 = vdwg.mxu0
      %v682 = vld [vmem:[%s346] sm:$0xff]
      %v683 = vld [vmem:[%s346 + $0x8] sm:$0xff]
      %v686 = vunpack.c.l.b16 %v682
      %v687 = vunpack.c.h.b16 %v682
      %v688 = vunpack.c.l.b16 %v683
      %v689 = vunpack.c.h.b16 %v683
      %v690 = vpack.c.b16 %v686, %v686
      %v691 = vpack.c.b16 %v687, %v687
      %v692 = vpack.c.b16 %v688, %v688
      %v693 = vpack.c.b16 %v689, %v689
      %v698 = vsel %vm598, %v693, 0
      %700 = vmatprep.subr.bf16.mxu0 0
      %701 = vmatpush1.bf16.msra.mxu0 %v542
      %702 = vmatprep.subr.bf16.mxu0 0
      %703 = vmatpush1.bf16.msra.mxu0 %v543
      %704 = vmatprep.subr.bf16.mxu0 0
      %705 = vmatpush1.bf16.msra.mxu0 %v544
      %706 = vmatprep.subr.bf16.mxu0 0
      %707 = vmatpush1.bf16.msra.mxu0 %v545
      %708 = vmatprep.subr.bf16.mxu0 0
      %709 = vmatpush1.bf16.msra.mxu0 %v546
      %710 = vmatprep.subr.bf16.mxu0 0
      %711 = vmatpush1.bf16.msra.mxu0 %v547
      %712 = vmatprep.subr.bf16.mxu0 0
      %713 = vmatpush1.bf16.msra.mxu0 %v548
      %714 = vmatprep.subr.bf16.mxu0 0
      %715 = vmatpush1.bf16.msra.mxu0 %v549
      %716 = vmatprep.subr.bf16.mxu0 0
      %717 = vmatpush1.bf16.msra.mxu0 %v550
      %718 = vmatprep.subr.bf16.mxu0 0
      %719 = vmatpush1.bf16.msra.mxu0 %v551
      %720 = vmatprep.subr.bf16.mxu0 0
      %721 = vmatpush1.bf16.msra.mxu0 %v552
      %722 = vmatprep.subr.bf16.mxu0 0
      %723 = vmatpush1.bf16.msra.mxu0 %v553
      %724 = vmatprep.subr.bf16.mxu0 0
      %725 = vmatpush1.bf16.msra.mxu0 %v554
      %726 = vmatprep.subr.bf16.mxu0 0
      %727 = vmatpush1.bf16.msra.mxu0 %v555
      %728 = vmatprep.subr.bf16.mxu0 0
      %729 = vmatpush1.bf16.msra.mxu0 %v556
      %730 = vmatprep.subr.bf16.mxu0 0
      %731 = vmatpush1.bf16.msra.mxu0 %v557
      %732 = vmatprep.mubr.bf16.mxu0 %v691
      %733 = vmatmul.mubr.bf16.gmra.mrb[0].mxu0 %v690
      %v734 = vpop.f32.mrb[0].mxu0
      %v735 = vadd.f32 %v415, %v734
      %v736 = vpop.f32.mrb[0].mxu0
      %v737 = vpop.f32.mrb[0].mxu0
      %v738 = vpop.f32.mrb[0].mxu0
      %739 = vdwg.mxu0
      %740 = vmatprep.subr.bf16.mxu0 0
      %741 = vmatpush1.bf16.msra.mxu0 %v558
      %742 = vmatprep.subr.bf16.mxu0 0
      %743 = vmatpush1.bf16.msra.mxu0 %v559
      %744 = vmatprep.subr.bf16.mxu0 0
      %745 = vmatpush1.bf16.msra.mxu0 %v560
      %746 = vmatprep.subr.bf16.mxu0 0
      %747 = vmatpush1.bf16.msra.mxu0 %v561
      %748 = vmatprep.subr.bf16.mxu0 0
      %749 = vmatpush1.bf16.msra.mxu0 %v562
      %750 = vmatprep.subr.bf16.mxu0 0
      %751 = vmatpush1.bf16.msra.mxu0 %v563
      %752 = vmatprep.subr.bf16.mxu0 0
      %753 = vmatpush1.bf16.msra.mxu0 %v564
      %754 = vmatprep.subr.bf16.mxu0 0
      %755 = vmatpush1.bf16.msra.mxu0 %v565
      %756 = vmatprep.subr.bf16.mxu0 0
      %757 = vmatpush1.bf16.msra.mxu0 %v566
      %758 = vmatprep.subr.bf16.mxu0 0
      %759 = vmatpush1.bf16.msra.mxu0 %v567
      %760 = vmatprep.subr.bf16.mxu0 0
      %761 = vmatpush1.bf16.msra.mxu0 %v568
      %762 = vmatprep.subr.bf16.mxu0 0
      %763 = vmatpush1.bf16.msra.mxu0 %v569
      %764 = vmatprep.subr.bf16.mxu0 0
      %765 = vmatpush1.bf16.msra.mxu0 0
      %766 = vmatprep.subr.bf16.mxu0 0
      %767 = vmatpush1.bf16.msra.mxu0 0
      %768 = vmatprep.subr.bf16.mxu0 0
      %769 = vmatpush1.bf16.msra.mxu0 0
      %770 = vmatprep.subr.bf16.mxu0 0
      %771 = vmatpush1.bf16.msra.mxu0 0
      %772 = vmatprep.mubr.bf16.mxu0 %v698
      %773 = vmatmul.mubr.bf16.gmra.mrb[0].mxu0 %v692
      %v774 = vpop.f32.mrb[0].mxu0
      %v775 = vadd.f32 %v735, %v774
      %v776 = vpop.f32.mrb[0].mxu0
      %v777 = vpop.f32.mrb[0].mxu0
      %v778 = vpop.f32.mrb[0].mxu0
      %779 = vdwg.mxu0
      %v780 = vmul.f32 %v677, %v677
      %v781 = vpack.c.bf16 %v780, %v780
      %v782 = vmul.f32 %v775, %v775
      %v783 = vpack.c.bf16 %v782, %v782
      %v784 = vld [vmem:[%s4] sm:$0xf]
      %v785 = vld [vmem:[%s4 + $0x4] sm:$0xf]
      %v786 = vld [vmem:[%s4 + $0x8] sm:$0xf]
      %v787 = vld [vmem:[%s4 + $0xc] sm:$0xf]
      %v788 = vld [vmem:[%s4 + $0x10] sm:$0xf]
      %v789 = vld [vmem:[%s4 + $0x14] sm:$0xf]
      %v790 = vld [vmem:[%s4 + $0x18] sm:$0xf]
      %v791 = vld [vmem:[%s4 + $0x1c] sm:$0xf]
      %v792 = vld [vmem:[%s4 + $0x20] sm:$0xf]
      %v793 = vld [vmem:[%s4 + $0x24] sm:$0xf]
      %v794 = vld [vmem:[%s4 + $0x28] sm:$0xf]
      %v795 = vld [vmem:[%s4 + $0x2c] sm:$0xf]
      %v796 = vld [vmem:[%s4 + $0x30] sm:$0xf]
      %v797 = vld [vmem:[%s4 + $0x34] sm:$0xf]
      %v798 = vld [vmem:[%s4 + $0x38] sm:$0xf]
      %v799 = vld [vmem:[%s4 + $0x3c] sm:$0xf]
      %v800 = vld [vmem:[%s5] sm:$0xf]
      %v801 = vld [vmem:[%s5 + $0x4] sm:$0xf]
      %v802 = vld [vmem:[%s5 + $0x8] sm:$0xf]
      %v803 = vld [vmem:[%s5 + $0xc] sm:$0xf]
      %v804 = vld [vmem:[%s5 + $0x10] sm:$0xf]
      %v805 = vld [vmem:[%s5 + $0x14] sm:$0xf]
      %v806 = vld [vmem:[%s5 + $0x18] sm:$0xf]
      %v807 = vld [vmem:[%s5 + $0x1c] sm:$0xf]
      %v808 = vld [vmem:[%s5 + $0x20] sm:$0xf]
      %v809 = vld [vmem:[%s5 + $0x24] sm:$0xf]
      %v810 = vld [vmem:[%s5 + $0x28] sm:$0xf]
      %v811 = vld [vmem:[%s5 + $0x2c] sm:$0xf]
      %v812 = vld [vmem:[%s5 + $0x30] sm:$0xf]
      %v813 = vld [vmem:[%s5 + $0x34] sm:$0xf]
      %v814 = vld [vmem:[%s5 + $0x38] sm:$0xf]
      %v815 = vld [vmem:[%s5 + $0x3c] sm:$0xf]
      %v832 = vunpack.c.l.b16 %v800
      %v833 = vunpack.c.l.b16 %v801
      %v834 = vunpack.c.l.b16 %v802
      %v835 = vunpack.c.l.b16 %v803
      %v836 = vunpack.c.l.b16 %v804
      %v837 = vunpack.c.l.b16 %v805
      %v838 = vunpack.c.l.b16 %v806
      %v839 = vunpack.c.l.b16 %v807
      %v840 = vunpack.c.l.b16 %v808
      %v841 = vunpack.c.l.b16 %v809
      %v842 = vunpack.c.l.b16 %v810
      %v843 = vunpack.c.l.b16 %v811
      %v844 = vunpack.c.l.b16 %v812
      %v845 = vunpack.c.l.b16 %v813
      %v846 = vunpack.c.l.b16 %v814
      %v847 = vunpack.c.l.b16 %v815
      %v848 = vpack.c.b16 %v833, %v832
      %v849 = vpack.c.b16 %v835, %v834
      %v850 = vpack.c.b16 %v837, %v836
      %v851 = vpack.c.b16 %v839, %v838
      %v852 = vpack.c.b16 %v841, %v840
      %v853 = vpack.c.b16 %v843, %v842
      %v854 = vpack.c.b16 %v845, %v844
      %v855 = vpack.c.b16 %v847, %v846
      %864 = vmatprep.subr.bf16.mxu0 0
      %865 = vmatpush1.bf16.msra.mxu0 %v848
      %866 = vmatprep.subr.bf16.mxu0 0
      %867 = vmatpush1.bf16.msra.mxu0 %v849
      %868 = vmatprep.subr.bf16.mxu0 0
      %869 = vmatpush1.bf16.msra.mxu0 %v850
      %870 = vmatprep.subr.bf16.mxu0 0
      %871 = vmatpush1.bf16.msra.mxu0 %v851
      %872 = vmatprep.subr.bf16.mxu0 0
      %873 = vmatpush1.bf16.msra.mxu0 %v852
      %874 = vmatprep.subr.bf16.mxu0 0
      %875 = vmatpush1.bf16.msra.mxu0 %v853
      %876 = vmatprep.subr.bf16.mxu0 0
      %877 = vmatpush1.bf16.msra.mxu0 %v854
      %878 = vmatprep.subr.bf16.mxu0 0
      %879 = vmatpush1.bf16.msra.mxu0 %v855
      %880 = vmatprep.subr.bf16.mxu0 0
      %881 = vmatpush1.bf16.msra.mxu0 0
      %882 = vmatprep.subr.bf16.mxu0 0
      %883 = vmatpush1.bf16.msra.mxu0 0
      %884 = vmatprep.subr.bf16.mxu0 0
      %885 = vmatpush1.bf16.msra.mxu0 0
      %886 = vmatprep.subr.bf16.mxu0 0
      %887 = vmatpush1.bf16.msra.mxu0 0
      %888 = vmatprep.subr.bf16.mxu0 0
      %889 = vmatpush1.bf16.msra.mxu0 0
      %890 = vmatprep.subr.bf16.mxu0 0
      %891 = vmatpush1.bf16.msra.mxu0 0
      %892 = vmatprep.subr.bf16.mxu0 0
      %893 = vmatpush1.bf16.msra.mxu0 0
      %894 = vmatprep.subr.bf16.mxu0 0
      %895 = vmatpush1.bf16.msra.mxu0 0
      %896 = vmatprep.mubr.bf16.mxu0 0
      %897 = vmatmul.mubr.bf16.gmra.mrb[0].mxu0 %v783
      %v898 = vpop.f32.mrb[0].mxu0
      %v899 = vadd.f32 0.0, %v898
      %v900 = vpop.f32.mrb[0].mxu0
      %v901 = vpop.f32.mrb[0].mxu0
      %v902 = vpop.f32.mrb[0].mxu0
      %903 = vdwg.mxu0
      %v920 = vunpack.c.l.b16 %v784
      %v921 = vunpack.c.l.b16 %v785
      %v922 = vunpack.c.l.b16 %v786
      %v923 = vunpack.c.l.b16 %v787
      %v924 = vunpack.c.l.b16 %v788
      %v925 = vunpack.c.l.b16 %v789
      %v926 = vunpack.c.l.b16 %v790
      %v927 = vunpack.c.l.b16 %v791
      %v928 = vunpack.c.l.b16 %v792
      %v929 = vunpack.c.l.b16 %v793
      %v930 = vunpack.c.l.b16 %v794
      %v931 = vunpack.c.l.b16 %v795
      %v932 = vunpack.c.l.b16 %v796
      %v933 = vunpack.c.l.b16 %v797
      %v934 = vunpack.c.l.b16 %v798
      %v935 = vunpack.c.l.b16 %v799
      %v936 = vpack.c.b16 %v921, %v920
      %v937 = vpack.c.b16 %v923, %v922
      %v938 = vpack.c.b16 %v925, %v924
      %v939 = vpack.c.b16 %v927, %v926
      %v940 = vpack.c.b16 %v929, %v928
      %v941 = vpack.c.b16 %v931, %v930
      %v942 = vpack.c.b16 %v933, %v932
      %v943 = vpack.c.b16 %v935, %v934
      %952 = vmatprep.subr.bf16.mxu0 0
      %953 = vmatpush1.bf16.msra.mxu0 %v936
      %954 = vmatprep.subr.bf16.mxu0 0
      %955 = vmatpush1.bf16.msra.mxu0 %v937
      %956 = vmatprep.subr.bf16.mxu0 0
      %957 = vmatpush1.bf16.msra.mxu0 %v938
      %958 = vmatprep.subr.bf16.mxu0 0
      %959 = vmatpush1.bf16.msra.mxu0 %v939
      %960 = vmatprep.subr.bf16.mxu0 0
      %961 = vmatpush1.bf16.msra.mxu0 %v940
      %962 = vmatprep.subr.bf16.mxu0 0
      %963 = vmatpush1.bf16.msra.mxu0 %v941
      %964 = vmatprep.subr.bf16.mxu0 0
      %965 = vmatpush1.bf16.msra.mxu0 %v942
      %966 = vmatprep.subr.bf16.mxu0 0
      %967 = vmatpush1.bf16.msra.mxu0 %v943
      %968 = vmatprep.subr.bf16.mxu0 0
      %969 = vmatpush1.bf16.msra.mxu0 0
      %970 = vmatprep.subr.bf16.mxu0 0
      %971 = vmatpush1.bf16.msra.mxu0 0
      %972 = vmatprep.subr.bf16.mxu0 0
      %973 = vmatpush1.bf16.msra.mxu0 0
      %974 = vmatprep.subr.bf16.mxu0 0
      %975 = vmatpush1.bf16.msra.mxu0 0
      %976 = vmatprep.subr.bf16.mxu0 0
      %977 = vmatpush1.bf16.msra.mxu0 0
      %978 = vmatprep.subr.bf16.mxu0 0
      %979 = vmatpush1.bf16.msra.mxu0 0
      %980 = vmatprep.subr.bf16.mxu0 0
      %981 = vmatpush1.bf16.msra.mxu0 0
      %982 = vmatprep.subr.bf16.mxu0 0
      %983 = vmatpush1.bf16.msra.mxu0 0
      %984 = vmatprep.mubr.bf16.mxu0 0
      %985 = vmatmul.mubr.bf16.gmra.mrb[0].mxu0 %v781
      %v986 = vpop.f32.mrb[0].mxu0
      %v987 = vadd.f32 %v899, %v986
      %v988 = vpop.f32.mrb[0].mxu0
      %v989 = vpop.f32.mrb[0].mxu0
      %v990 = vpop.f32.mrb[0].mxu0
      %991 = vdwg.mxu0
      %v992 = vld [vmem:[%s6] sm:$0x1]
      %v994 = vlaneseq
      %v995 = vshrl.u32 %v994, 7
      %v996 = vsub.s32 0, %v995
      %v997 = vrot.slane %v992, %v996
      %v999 = vadd.f32 %v987, %v997
      %v1000 = vmul.f32 %v999, %v999
      %v1001 = vpack.c.bf16 %v1000, %v1000
      %v1002 = vld [vmem:[%s7] sm:$0xf]
      %v1003 = vld [vmem:[%s7 + $0x4] sm:$0xf]
      %v1004 = vld [vmem:[%s7 + $0x8] sm:$0xf]
      %v1005 = vld [vmem:[%s7 + $0xc] sm:$0xf]
      %v1006 = vld [vmem:[%s7 + $0x10] sm:$0xf]
      %v1007 = vld [vmem:[%s7 + $0x14] sm:$0xf]
      %v1008 = vld [vmem:[%s7 + $0x18] sm:$0xf]
      %v1009 = vld [vmem:[%s7 + $0x1c] sm:$0xf]
      %v1010 = vld [vmem:[%s7 + $0x20] sm:$0xf]
      %v1011 = vld [vmem:[%s7 + $0x24] sm:$0xf]
      %v1012 = vld [vmem:[%s7 + $0x28] sm:$0xf]
      %v1013 = vld [vmem:[%s7 + $0x2c] sm:$0xf]
      %v1014 = vld [vmem:[%s7 + $0x30] sm:$0xf]
      %v1015 = vld [vmem:[%s7 + $0x34] sm:$0xf]
      %v1016 = vld [vmem:[%s7 + $0x38] sm:$0xf]
      %v1017 = vld [vmem:[%s7 + $0x3c] sm:$0xf]
      %v1018 = vld [vmem:[%s8] sm:$0x1]
      %v1020 = vlaneseq
      %v1021 = vshrl.u32 %v1020, 7
      %v1022 = vsub.s32 0, %v1021
      %v1023 = vrot.slane %v1018, %v1022
      %v1041 = vunpack.c.l.b16 %v1002
      %v1042 = vunpack.c.l.b16 %v1003
      %v1043 = vunpack.c.l.b16 %v1004
      %v1044 = vunpack.c.l.b16 %v1005
      %v1045 = vunpack.c.l.b16 %v1006
      %v1046 = vunpack.c.l.b16 %v1007
      %v1047 = vunpack.c.l.b16 %v1008
      %v1048 = vunpack.c.l.b16 %v1009
      %v1049 = vunpack.c.l.b16 %v1010
      %v1050 = vunpack.c.l.b16 %v1011
      %v1051 = vunpack.c.l.b16 %v1012
      %v1052 = vunpack.c.l.b16 %v1013
      %v1053 = vunpack.c.l.b16 %v1014
      %v1054 = vunpack.c.l.b16 %v1015
      %v1055 = vunpack.c.l.b16 %v1016
      %v1056 = vunpack.c.l.b16 %v1017
      %v1057 = vpack.c.b16 %v1042, %v1041
      %v1058 = vpack.c.b16 %v1044, %v1043
      %v1059 = vpack.c.b16 %v1046, %v1045
      %v1060 = vpack.c.b16 %v1048, %v1047
      %v1061 = vpack.c.b16 %v1050, %v1049
      %v1062 = vpack.c.b16 %v1052, %v1051
      %v1063 = vpack.c.b16 %v1054, %v1053
      %v1064 = vpack.c.b16 %v1056, %v1055
      %1073 = vmatprep.subr.bf16.mxu0 0
      %1074 = vmatpush1.bf16.msra.mxu0 %v1057
      %1075 = vmatprep.subr.bf16.mxu0 0
      %1076 = vmatpush1.bf16.msra.mxu0 %v1058
      %1077 = vmatprep.subr.bf16.mxu0 0
      %1078 = vmatpush1.bf16.msra.mxu0 %v1059
      %1079 = vmatprep.subr.bf16.mxu0 0
      %1080 = vmatpush1.bf16.msra.mxu0 %v1060
      %1081 = vmatprep.subr.bf16.mxu0 0
      %1082 = vmatpush1.bf16.msra.mxu0 %v1061
      %1083 = vmatprep.subr.bf16.mxu0 0
      %1084 = vmatpush1.bf16.msra.mxu0 %v1062
      %1085 = vmatprep.subr.bf16.mxu0 0
      %1086 = vmatpush1.bf16.msra.mxu0 %v1063
      %1087 = vmatprep.subr.bf16.mxu0 0
      %1088 = vmatpush1.bf16.msra.mxu0 %v1064
      %1089 = vmatprep.subr.bf16.mxu0 0
      %1090 = vmatpush1.bf16.msra.mxu0 0
      %1091 = vmatprep.subr.bf16.mxu0 0
      %1092 = vmatpush1.bf16.msra.mxu0 0
      %1093 = vmatprep.subr.bf16.mxu0 0
      %1094 = vmatpush1.bf16.msra.mxu0 0
      %1095 = vmatprep.subr.bf16.mxu0 0
      %1096 = vmatpush1.bf16.msra.mxu0 0
      %1097 = vmatprep.subr.bf16.mxu0 0
      %1098 = vmatpush1.bf16.msra.mxu0 0
      %1099 = vmatprep.subr.bf16.mxu0 0
      %1100 = vmatpush1.bf16.msra.mxu0 0
      %1101 = vmatprep.subr.bf16.mxu0 0
      %1102 = vmatpush1.bf16.msra.mxu0 0
      %1103 = vmatprep.subr.bf16.mxu0 0
      %1104 = vmatpush1.bf16.msra.mxu0 0
      %1105 = vmatprep.mubr.bf16.mxu0 0
      %1106 = vmatmul.mubr.bf16.gmra.mrb[0].mxu0 %v1001
      %v1107 = vpop.f32.mrb[0].mxu0
      %v1108 = vadd.f32 %v1023, %v1107
      %v1109 = vpop.f32.mrb[0].mxu0
      %v1110 = vpop.f32.mrb[0].mxu0
      %v1111 = vpop.f32.mrb[0].mxu0
      %1112 = vdwg.mxu0
      %1113 = vst [vmem:[%s350] sm:$0xff] %v1108
      %p1114 = scmp.lt.s32.totalorder %s20, 1
      %s1115 = scalar_select %p1114, %s20, 1
      %s1116 = smul.addr %s1115, 8
      %s1117 = scalar_lea.vmem %s9, %s1116
      // Predicated region
      $region57: #{convnet_forward.1} parent=55 // pred_check
        %p1118 = pneg %p237
      $region58: #{convnet_forward.1} parent=55 // pred_check_branch
        %1120 = sbr.rel (%p1118) target = $region60
      $region59: #{convnet_forward.1} parent=55 // pred_region
        _
      $region60: #{convnet_forward.1} parent=55 // pred_fallthru
        _
    $region56: #{convnet_forward.1} parent=5 // pred_fallthru
      _
    %p1121 = scmp.le.s32.totalorder 2, %s15
    // Predicated region
    $region61: #{convnet_forward.1} parent=5 // pred_check
      %p1122 = pneg %p1121
    $region62: #{convnet_forward.1} parent=5 // pred_check_branch
      %1124 = sbr.rel (%p1122) target = $region64
    $region63: #{convnet_forward.1} parent=5 // pred_region
      %s1125 = ssub.s32 %s15, 2
      // Predicated region
      $region65: #{convnet_forward.1} parent=63 // pred_check
        %p1126 = pneg %p243
      $region66: #{convnet_forward.1} parent=63 // pred_check_branch
        %1128 = sbr.rel (%p1126) target = $region68
      $region67: #{convnet_forward.1} parent=63 // pred_region
        %p1129 = scmp.lt.s32.totalorder %s21, 1
        %s1130 = scalar_select %p1129, %s21, 1
        %s1131 = smul.addr %s1130, 8
        %s1132 = scalar_lea.vmem %s9, %s1131
      $region68: #{convnet_forward.1} parent=63 // pred_fallthru
        _
    $region64: #{convnet_forward.1} parent=5 // pred_fallthru
      _
  $region6: #{convnet_forward.1} parent=0 // loop_footer
    %s19 = sadd.s32 1, %s15
  $region7: #{convnet_forward.1} parent=0 // loop_footer_branch
    %14 = sbr.rel target = $region3
  $region8: #{convnet_forward.1} parent=0 // loop_exit
    _

</llo_original>
